<compile_context>
chip_gen: v7x
topology: tpu7x:2x2x1
jax: 0.10.0
libtpu: 0.0.40
codegen_flags: <defaults>
</compile_context>

<pallas_src>
import jax
import jax.numpy as jnp
from jax.experimental import pallas as pl
from jax.experimental.pallas import tpu as pltpu


def _mean_pool_kernel(x_ref, o_ref):
    # x_ref: (BT, S, D), o_ref: (BT, D)
    x = x_ref[...].astype(jnp.float32)                  # (BT, S, D)
    inv_s = jnp.float32(1.0 / x_ref.shape[1])           # static S -> compile-time const
    pooled = jnp.sum(x, axis=1) * inv_s                 # (BT, D), VPU/XLU reduce
    o_ref[...] = pooled.astype(o_ref.dtype)


def _pick_batch_tile(B, S, D, itemsize, max_tile_bytes=8 << 20):
    """Largest batch tile (multiple of 8) with <= ~8 MiB per input buffer."""
    bt = (max_tile_bytes // max(1, S * D * itemsize)) // 8 * 8
    bt = int(max(8, min(bt, 1024)))
    # Don't pad far past the actual batch size.
    bt = min(bt, ((B + 7) // 8) * 8)
    # Keep >= 2 grid steps when B is big enough (v7x has 2 TensorCores).
    if B > 16:
        half = ((B + 15) // 16) * 8      # ceil(B/2) rounded up to multiple of 8
        bt = max(8, min(bt, half))
    return bt


def fuser_v0(x):
    """Mean over dim -2.  x: (..., S, D) -> (..., D)."""
    *lead, S, D = x.shape
    B = 1
    for d in lead:
        B *= d
    x3 = x.reshape(B, S, D)

    itemsize = jnp.dtype(x.dtype).itemsize
    bt = _pick_batch_tile(B, S, D, itemsize)

    # Pad batch to a multiple of the tile; padded rows are sliced off at the end.
    b_pad = pl.cdiv(B, bt) * bt
    if b_pad != B:
        x3 = jnp.pad(x3, ((0, b_pad - B), (0, 0), (0, 0)))

    grid = (b_pad // bt,)

    # Double-buffered input + output, plus slack.
    vmem_bytes = 2 * bt * S * D * itemsize + 2 * bt * D * itemsize + (1 << 20)
    vmem_bytes = int(min(max(vmem_bytes, 8 << 20), 32 << 20))

    out = pl.pallas_call(
        _mean_pool_kernel,
        out_shape=jax.ShapeDtypeStruct((b_pad, D), x.dtype),
        grid=grid,
        in_specs=[
            pl.BlockSpec((bt, S, D), lambda i: (i, 0, 0)),   # one batch tile
        ],
        out_specs=pl.BlockSpec((bt, D), lambda i: (i, 0)),   # dense (BT, D) slab
        compiler_params=pltpu.CompilerParams(
            dimension_semantics=("parallel",),
            vmem_limit_bytes=vmem_bytes,
        ),
    )(x3)

    out = out[:B]
    return out.reshape(*lead, D)


def fuser_v0_ref(x):
    """Pure-JAX reference matching PyTorch Fuser_V0.forward."""
    return jnp.mean(x, axis=-2)


if __name__ == "__main__":
    d_model = 128
    B, S = 2, 8

    key = jax.random.PRNGKey(0)
    x = jax.random.normal(key, (B, S, d_model), dtype=jnp.float32)

    out = jax.block_until_ready(fuser_v0(x))
    ref = fuser_v0_ref(x)

    assert out.shape == (B, d_model), out.shape
    assert jnp.allclose(out, ref, atol=1e-5, rtol=1e-5), (
        f"max abs err = {jnp.max(jnp.abs(out - ref))}")
    print("KERNEL_OK")
</pallas_src>

<mosaic_0001>
module attributes {stable_mosaic.version = 11 : i64} {
  func.func @_mean_pool_kernel(%arg0: i32, %arg1: memref<8x8x128xf32, #tpu.memory_space<vmem>>, %arg2: memref<8x128xf32, #tpu.memory_space<vmem>>) attributes {dimension_semantics = [#tpu.dimension_semantics<parallel>], iteration_bounds = array<i64: 1>, scalar_prefetch = 0 : i64, scratch_operands = 0 : i64, tpu.core_type = #tpu.core_type<tc>, window_params = [{transform_indices = @transform_0, window_bounds = array<i64: 8, 8, 128>}, {transform_indices = @transform_1, window_bounds = array<i64: 8, 128>}]} {
    %c0 = arith.constant 0 : index
    %c0_0 = arith.constant 0 : index
    %c0_1 = arith.constant 0 : index
    %0 = vector.load %arg1[%c0, %c0_0, %c0_1] : memref<8x8x128xf32, #tpu.memory_space<vmem>>, vector<8x8x128xf32>
    %cst = arith.constant dense<0.000000e+00> : vector<8x128xf32>
    %1 = vector.multi_reduction <add>, %0, %cst [1] : vector<8x8x128xf32> to vector<8x128xf32>
    %cst_2 = arith.constant 1.250000e-01 : f32
    %2 = vector.broadcast %cst_2 : f32 to vector<8x128xf32>
    %3 = arith.mulf %1, %2 : vector<8x128xf32>
    %c0_3 = arith.constant 0 : index
    %c0_4 = arith.constant 0 : index
    %4 = vector.load %arg2[%c0_3, %c0_4] : memref<8x128xf32, #tpu.memory_space<vmem>>, vector<8x128xf32>
    tpu.vector_store %arg2[%c0_3, %c0_4], %3 {strides = array<i32>} : memref<8x128xf32, #tpu.memory_space<vmem>>, vector<8x128xf32>,
    return
  }
  func.func @transform_0(%arg0: i32) -> (i32, i32, i32) {
    %c0_i32 = arith.constant 0 : i32
    %c0_i32_0 = arith.constant 0 : i32
    %c0_i32_1 = arith.constant 0 : i32
    return %arg0, %c0_i32, %c0_i32_0 : i32, i32, i32
  }
  func.func @transform_1(%arg0: i32) -> (i32, i32) {
    %c0_i32 = arith.constant 0 : i32
    %c0_i32_0 = arith.constant 0 : i32
    return %arg0, %c0_i32 : i32, i32
  }
}

</mosaic_0001>

<llo_original>
// kernel: tpu_custom_call.1
$region0: #{tpu_custom_call.1}
  #allocation0 [shape = 'u32[]', space=smem, size = 0x4, offset = 0x4, fixed_abs, tag = 'smem constant byte address 0x4 - core index']
  #allocation1 [shape = 'u32[144,128]{1,0:T(1,128)}', space=vmem, size = 0x12000, scoped, tag = 'internal scratch']
  %s0 = inlined_call_operand.hbm [shape: f32[8,8,128], index: 0, kind: input, shape index: {}]
  %s1 = inlined_call_operand.hbm [shape: f32[8,128], index: 1, kind: output, shape index: {}]
  %s2 = sld [smem:[#allocation0]]
  $region18: #{tpu_custom_call.1} parent=0
    _
  %s4 = ssub.s32 1, %s2
  %s5 = scalar_select 0, %s4, %s2
  $region1: #{tpu_custom_call.1} parent=0
    #allocation2 [shape = 'u8[32768]{0}', space=vmem, size = 0x8000, scoped, tag = 'input window, operand 0, single buffered']
    #allocation3 [shape = 's32[1]{0}', space=sflag, size = 0x4, scoped, tag = 'scoped memory for tpu_custom_call.1']
    #allocation4 [shape = 's32[1]{0}', space=sflag, size = 0x4, scoped, tag = 'scoped memory for tpu_custom_call.1']
    #allocation5 [shape = 'u8[4096]{0}', space=vmem, size = 0x1000, scoped, tag = 'output window, operand 0, single buffered']
    %6 = vsyncpa [#allocation3], 0
    %7 = vsyncpa [#allocation4], 0
    // Predicated region
    $region2: #{tpu_custom_call.1} parent=1 // pred_check
      _
    $region3: #{tpu_custom_call.1} parent=1 // pred_check_branch
      %9 = sbr.rel (0) target = $region5
    $region4: #{tpu_custom_call.1} parent=1 // pred_region
      %s11 = ssub.s32 1024, 1024
      %12 = vsyncadd [#allocation3], %s11
      %s13 = sshll.u32 [#allocation2], 4
      %s14 = int_to_ptr.vmem [resolvable:$true] %s13
      %19 = dma.hbm_to_vmem [thread:$0]  %s0, 1024, %s14, [#allocation3], 128, 128, 8
    $region5: #{tpu_custom_call.1} parent=1 // pred_fallthru
      _
    // Predicated region
    $region6: #{tpu_custom_call.1} parent=1 // pred_check
      _
    $region7: #{tpu_custom_call.1} parent=1 // pred_check_branch
      %21 = sbr.rel (0) target = $region9
    $region8: #{tpu_custom_call.1} parent=1 // pred_region
      %22 = dma.done [#allocation3], 1024
    $region9: #{tpu_custom_call.1} parent=1 // pred_fallthru
      _
    %v23 = vld [vmem:[#allocation2] sm:$0xff]
    %v24 = vld [vmem:[#allocation2 + $0x8] sm:$0xff]
    %v25 = vld [vmem:[#allocation2 + $0x10] sm:$0xff]
    %v26 = vld [vmem:[#allocation2 + $0x18] sm:$0xff]
    %v27 = vld [vmem:[#allocation2 + $0x20] sm:$0xff]
    %v28 = vld [vmem:[#allocation2 + $0x28] sm:$0xff]
    %v29 = vld [vmem:[#allocation2 + $0x30] sm:$0xff]
    %v30 = vld [vmem:[#allocation2 + $0x38] sm:$0xff]
    %v31 = vrot.slane %v23, 4
    %v32 = vadd.f32 %v23, %v31
    %v33 = vrot.slane %v32, 2
    %v34 = vadd.f32 %v32, %v33
    %v35 = vrot.slane %v34, 1
    %v36 = vadd.f32 %v34, %v35
    %v37 = vrot.slane %v24, 4
    %v38 = vadd.f32 %v24, %v37
    %v39 = vrot.slane %v38, 2
    %v40 = vadd.f32 %v38, %v39
    %v41 = vrot.slane %v40, 1
    %v42 = vadd.f32 %v40, %v41
    %v43 = vrot.slane %v25, 4
    %v44 = vadd.f32 %v25, %v43
    %v45 = vrot.slane %v44, 2
    %v46 = vadd.f32 %v44, %v45
    %v47 = vrot.slane %v46, 1
    %v48 = vadd.f32 %v46, %v47
    %v49 = vrot.slane %v26, 4
    %v50 = vadd.f32 %v26, %v49
    %v51 = vrot.slane %v50, 2
    %v52 = vadd.f32 %v50, %v51
    %v53 = vrot.slane %v52, 1
    %v54 = vadd.f32 %v52, %v53
    %v55 = vrot.slane %v27, 4
    %v56 = vadd.f32 %v27, %v55
    %v57 = vrot.slane %v56, 2
    %v58 = vadd.f32 %v56, %v57
    %v59 = vrot.slane %v58, 1
    %v60 = vadd.f32 %v58, %v59
    %v61 = vrot.slane %v28, 4
    %v62 = vadd.f32 %v28, %v61
    %v63 = vrot.slane %v62, 2
    %v64 = vadd.f32 %v62, %v63
    %v65 = vrot.slane %v64, 1
    %v66 = vadd.f32 %v64, %v65
    %v67 = vrot.slane %v29, 4
    %v68 = vadd.f32 %v29, %v67
    %v69 = vrot.slane %v68, 2
    %v70 = vadd.f32 %v68, %v69
    %v71 = vrot.slane %v70, 1
    %v72 = vadd.f32 %v70, %v71
    %v73 = vrot.slane %v30, 4
    %v74 = vadd.f32 %v30, %v73
    %v75 = vrot.slane %v74, 2
    %v76 = vadd.f32 %v74, %v75
    %v77 = vrot.slane %v76, 1
    %v78 = vadd.f32 %v76, %v77
    %v79 = vmul.f32 %v36, 0.125
    %v80 = vmul.f32 %v42, 0.125
    %v81 = vmul.f32 %v48, 0.125
    %v82 = vmul.f32 %v54, 0.125
    %v83 = vmul.f32 %v60, 0.125
    %v84 = vmul.f32 %v66, 0.125
    %v85 = vmul.f32 %v72, 0.125
    %v86 = vmul.f32 %v78, 0.125
    %vm95 = vcmask 1041409
    %v96 = vsel %vm95, %v80, %v79
    %vm97 = vcmask 1042434
    %v98 = vsel %vm97, %v81, %v96
    %vm99 = vcmask 1043459
    %v100 = vsel %vm99, %v82, %v98
    %vm101 = vcmask 1044484
    %v102 = vsel %vm101, %v83, %v100
    %vm103 = vcmask 1045509
    %v104 = vsel %vm103, %v84, %v102
    %vm105 = vcmask 1046534
    %v106 = vsel %vm105, %v85, %v104
    %vm107 = vcmask 1047559
    %v108 = vsel %vm107, %v86, %v106
    %110 = vst [vmem:[#allocation5] sm:$0xff] %v108
    // Predicated region
    $region10: #{tpu_custom_call.1} parent=1 // pred_check
      _
    $region11: #{tpu_custom_call.1} parent=1 // pred_check_branch
      %112 = sbr.rel (0) target = $region13
    $region12: #{tpu_custom_call.1} parent=1 // pred_region
      %s114 = ssub.s32 128, 128
      %115 = vsyncadd [#allocation4], %s114
      %s117 = sshll.u32 [#allocation5], 4
      %s118 = int_to_ptr.vmem [resolvable:$true] %s117
      %120 = dma.vmem_to_hbm [thread:$0]  %s118, 128, %s1, [#allocation4]
    $region13: #{tpu_custom_call.1} parent=1 // pred_fallthru
      _
    // Predicated region
    $region14: #{tpu_custom_call.1} parent=1 // pred_check
      _
    $region15: #{tpu_custom_call.1} parent=1 // pred_check_branch
      %122 = sbr.rel (0) target = $region17
    $region16: #{tpu_custom_call.1} parent=1 // pred_region
      %123 = dma.done [#allocation4], 128
    $region17: #{tpu_custom_call.1} parent=1 // pred_fallthru
      _
    %124 = vsyncpa [#allocation3], 1
    %125 = vsyncpa [#allocation4], 1

</llo_original>
